<compile_context>
chip_gen: v7x
topology: tpu7x:2x2x1
jax: 0.10.0
libtpu: 0.0.40
codegen_flags: <defaults>
</compile_context>

<pallas_src>
import numpy as np
import jax
import jax.numpy as jnp
from jax.experimental import pallas as pl
from jax.experimental.pallas import tpu as pltpu

N_QUBITS = 4
DIM = 2 ** N_QUBITS          # 16
HIDDEN = 64
N_CLASSES = 2

# ---------------- gate matrices & fixed-unitary construction (host glue) -----
I2 = np.eye(2, dtype=np.complex128)
X_MAT = np.array([[0, 1], [1, 0]], dtype=np.complex128)
P0 = np.array([[1, 0], [0, 0]], dtype=np.complex128)
P1 = np.array([[0, 0], [0, 1]], dtype=np.complex128)


def rx_mat(t):
    c, s = np.cos(t / 2), np.sin(t / 2)
    return np.array([[c, -1j * s], [-1j * s, c]], dtype=np.complex128)


def ry_mat(t):
    c, s = np.cos(t / 2), np.sin(t / 2)
    return np.array([[c, -s], [s, c]], dtype=np.complex128)


def rz_mat(t):
    return np.array([[np.exp(-1j * t / 2), 0], [0, np.exp(1j * t / 2)]],
                    dtype=np.complex128)


def kron_list(mats):
    out = mats[0]
    for m in mats[1:]:
        out = np.kron(out, m)
    return out


def single(U, wire):
    mats = [I2] * N_QUBITS
    mats[wire] = U
    return kron_list(mats)


def controlled(U, ctrl, tgt):
    a = [I2] * N_QUBITS
    a[ctrl] = P0
    b = [I2] * N_QUBITS
    b[ctrl] = P1
    b[tgt] = U
    return kron_list(a) + kron_list(b)


def build_fixed_unitary(rx_p, ry_p, rz_p, crx_p):
    U = np.eye(DIM, dtype=np.complex128)
    for i in range(N_QUBITS):                       # trainable single-qubit layer
        U = single(rx_mat(rx_p[i]), i) @ U
        U = single(ry_mat(ry_p[i]), i) @ U
        U = single(rz_mat(rz_p[i]), i) @ U
    for i in range(N_QUBITS - 1):                   # entangling layer
        U = controlled(rx_mat(crx_p[i]), i, i + 1) @ U   # CRX
        U = controlled(X_MAT, i, i + 1) @ U              # CNOT
    return U


# -------------- folded-parameter construction (host glue, done once) ---------
def make_bit_table():
    # bits_T[k, i] = bit i of basis index k, wire 0 = MSB (torchquantum order)
    bits_T = np.zeros((DIM, N_QUBITS), dtype=np.float64)
    for k in range(DIM):
        for i in range(N_QUBITS):
            bits_T[k, i] = (k >> (N_QUBITS - 1 - i)) & 1
    return bits_T


def fold_params(U, w1, b1, w2, b2):
    """Precompute everything the kernel needs, in batch-on-lanes layout."""
    bits_T = make_bit_table()                                   # (16, 4)
    pop = bits_T.sum(axis=1)
    phase = (-1j) ** pop                                        # (-i)^popcount
    pre, pim = np.real(phase), np.imag(phase)                   # (16,)
    Ur, Ui = np.real(U), np.imag(U)
    # psi = U @ (phase ⊙ mag)  ->  [re; im] = W @ mag with W real (32, 16)
    A_re = Ur * pre[None, :] - Ui * pim[None, :]
    A_im = Ur * pim[None, :] + Ui * pre[None, :]
    W = np.concatenate([A_re, A_im], axis=0)                    # (32, 16)
    # fold PauliZ signs into fc1:  h = w1^T @ (zmat^T @ probs) = M1 @ probs
    zmat = 1.0 - 2.0 * bits_T                                   # (16, 4)
    M1 = (zmat @ np.asarray(w1)).T                              # (64, 16)
    smask = bits_T                                              # (16, 4)
    # fold fc2 + 2-class log_softmax: only d = logits1 - logits0 is needed
    w2a = np.asarray(w2)                                        # (64, 2)
    b2a = np.asarray(b2).reshape(-1)                            # (2,)
    vrow = (w2a[:, 1] - w2a[:, 0]).reshape(1, HIDDEN)           # (1, 64)
    db = np.array([[b2a[1] - b2a[0]]])                          # (1, 1)

    f32 = lambda a: jnp.asarray(a, dtype=jnp.float32)
    return (f32(smask), f32(W), f32(M1),
            f32(np.reshape(b1, (HIDDEN, 1))),
            f32(vrow), f32(db))


# ---------------------------- Pallas kernel ----------------------------------
def hybrid_kernel(xT_ref, smask_ref, w_ref, m1_ref, b1_ref, vrow_ref, db_ref,
                  out_ref):
    xT = xT_ref[...]                                 # (4, TB)  batch on lanes
    half = xT * 0.5
    c = jnp.cos(half)                                # (4, TB)
    s = jnp.sin(half)

    sm = smask_ref[...]                              # (16, 4) constant 0/1 bits

    # RX-encoding magnitude of |0..0>:
    #   mag[k, b] = prod_i ( cos(x_i/2) if bit_i(k)==0 else sin(x_i/2) )
    # term_i = c_i + bit_i * (s_i - c_i)   (single-mask form)
    d0 = s[0:1, :] - c[0:1, :]
    mag = c[0:1, :] + sm[:, 0:1] * d0                # (16, TB)
    for i in range(1, N_QUBITS):
        di = s[i:i + 1, :] - c[i:i + 1, :]
        mag = mag * (c[i:i + 1, :] + sm[:, i:i + 1] * di)

    # phase table + complex unitary folded into one real matmul: (32,16)@(16,TB)
    reim = jnp.dot(w_ref[...], mag, preferred_element_type=jnp.float32)
    re = reim[0:DIM, :]                              # (16, TB)
    im = reim[DIM:2 * DIM, :]                        # (16, TB)
    probs = re * re + im * im                        # |psi|^2, (16, TB)

    # MeasureAll(PauliZ) + fc1 folded:  h = (zmat@w1)^T @ probs + b1
    h = jnp.dot(m1_ref[...], probs, preferred_element_type=jnp.float32) \
        + b1_ref[...]
    h = jnp.maximum(h, 0.0)                          # (64, TB)

    # fc2 + 2-class log_softmax folded: d = logits1 - logits0 = vrow@h + db
    d = jnp.dot(vrow_ref[...], h, preferred_element_type=jnp.float32) \
        + db_ref[...]                                # (1, TB)
    # softplus(d), closed form (no cross-lane/sublane reductions)
    sp = jnp.maximum(d, 0.0) + jnp.log(1.0 + jnp.exp(-jnp.abs(d)))
    out_ref[0:1, :] = -sp                            # log p(class 0)
    out_ref[1:2, :] = d - sp                         # log p(class 1)


# ------------------------------- wrapper --------------------------------------
def _round_up(n, m):
    return ((n + m - 1) // m) * m


def hybrid_forward(x, folded, tb=8192):
    """x: (B, n_qubits) float. Returns (B, 2) log-probs."""
    smask, W, M1, b1c, vrow, db = folded
    B = x.shape[0]

    tb_eff = min(tb, _round_up(B, 128))              # lane-aligned batch tile
    Bp = _round_up(B, tb_eff)
    grid = (Bp // tb_eff,)

    xf = jnp.asarray(x, dtype=jnp.float32)
    x_pad = jnp.pad(xf, ((0, Bp - B), (0, 0)))
    xT = x_pad.T                                     # (4, Bp) batch on lanes

    resident = lambda i: (0, 0)

    outT = pl.pallas_call(
        hybrid_kernel,
        out_shape=jax.ShapeDtypeStruct((N_CLASSES, Bp), jnp.float32),
        grid_spec=pltpu.PrefetchScalarGridSpec(
            num_scalar_prefetch=0,
            grid=grid,
            in_specs=[
                pl.BlockSpec((N_QUBITS, tb_eff), lambda i: (0, i)),   # x^T tile
                pl.BlockSpec((DIM, N_QUBITS), resident),              # smask (16,4)
                pl.BlockSpec((2 * DIM, DIM), resident),               # W (32,16)
                pl.BlockSpec((HIDDEN, DIM), resident),                # M1 (64,16)
                pl.BlockSpec((HIDDEN, 1), resident),                  # b1 (64,1)
                pl.BlockSpec((1, HIDDEN), resident),                  # vrow (1,64)
                pl.BlockSpec((1, 1), resident),                       # db (1,1)
            ],
            out_specs=pl.BlockSpec((N_CLASSES, tb_eff), lambda i: (0, i)),
        ),
        compiler_params=pltpu.CompilerParams(
            dimension_semantics=("parallel",),
            vmem_limit_bytes=32 * 1024 * 1024),
    )(xT, smask, W, M1, b1c, vrow, db)

    return outT[:, :B].T                             # (B, 2)


# ------------------------- pure numpy reference --------------------------------
def reference_forward(x_np, U, w1, b1, w2, b2):
    B = x_np.shape[0]
    bits_T = make_bit_table()
    c = np.cos(x_np / 2.0)
    s = np.sin(x_np / 2.0)
    psi0 = np.ones((B, DIM), dtype=np.complex128)
    for k in range(DIM):
        amp = np.ones((B,), dtype=np.complex128)
        for i in range(N_QUBITS):
            amp = amp * (c[:, i] if bits_T[k, i] == 0 else -1j * s[:, i])
        psi0[:, k] = amp
    psi = psi0 @ U.T
    probs = np.abs(psi) ** 2
    zmat = 1.0 - 2.0 * bits_T
    expz = probs @ zmat
    h = np.maximum(expz @ w1 + b1, 0.0)
    logits = h @ w2 + b2
    m = logits.max(axis=1, keepdims=True)
    lse = np.log(np.exp(logits - m).sum(axis=1, keepdims=True)) + m
    return logits - lse


# --------------------------------- main ----------------------------------------
if __name__ == "__main__":
    # deterministic trainable parameters (synthetic; shapes from __init__)
    rng = np.random.default_rng(0)
    rx_p = rng.uniform(0.0, 2.0 * np.pi, N_QUBITS)
    ry_p = rng.uniform(0.0, 2.0 * np.pi, N_QUBITS)
    rz_p = rng.uniform(0.0, 2.0 * np.pi, N_QUBITS)
    crx_p = rng.uniform(0.0, 2.0 * np.pi, N_QUBITS - 1)
    U = build_fixed_unitary(rx_p, ry_p, rz_p, crx_p)            # (16,16) complex

    w1_np = rng.uniform(-0.5, 0.5, (N_QUBITS, HIDDEN))          # fc1: 4 -> 64
    b1_np = rng.uniform(-0.5, 0.5, (1, HIDDEN))
    w2_np = rng.uniform(-0.125, 0.125, (HIDDEN, N_CLASSES))     # fc2: 64 -> 2
    b2_np = rng.uniform(-0.125, 0.125, (1, N_CLASSES))

    folded = fold_params(U, w1_np, b1_np, w2_np, b2_np)         # built once

    # deterministic example input: batch=8, n_qubits=4 rotation angles
    key = jax.random.PRNGKey(0)
    x = jax.random.normal(key, (8, N_QUBITS), dtype=jnp.float32)

    out = hybrid_forward(x, folded)
    out = jax.block_until_ready(out)

    ref = reference_forward(np.asarray(x, dtype=np.float64), U,
                            w1_np, b1_np, w2_np, b2_np)
    np.testing.assert_allclose(np.asarray(out), ref, rtol=1e-4, atol=1e-4)

    print("KERNEL_OK")
</pallas_src>

<mosaic_0001>
module attributes {stable_mosaic.version = 11 : i64} {
  func.func @hybrid_kernel(%arg0: i32, %arg1: memref<4x128xf32, #tpu.memory_space<vmem>>, %arg2: memref<16x4xf32, #tpu.memory_space<vmem>>, %arg3: memref<32x16xf32, #tpu.memory_space<vmem>>, %arg4: memref<64x16xf32, #tpu.memory_space<vmem>>, %arg5: memref<64x1xf32, #tpu.memory_space<vmem>>, %arg6: memref<1x64xf32, #tpu.memory_space<vmem>>, %arg7: memref<1x1xf32, #tpu.memory_space<vmem>>, %arg8: memref<2x128xf32, #tpu.memory_space<vmem>>) attributes {dimension_semantics = [#tpu.dimension_semantics<parallel>], iteration_bounds = array<i64: 1>, scalar_prefetch = 0 : i64, scratch_operands = 0 : i64, tpu.core_type = #tpu.core_type<tc>, window_params = [{transform_indices = @transform_0, window_bounds = array<i64: 4, 128>}, {pipeline_mode = #tpu.pipeline_mode<synchronous>, transform_indices = @transform_1, window_bounds = array<i64: 16, 4>}, {pipeline_mode = #tpu.pipeline_mode<synchronous>, transform_indices = @transform_2, window_bounds = array<i64: 32, 16>}, {pipeline_mode = #tpu.pipeline_mode<synchronous>, transform_indices = @transform_3, window_bounds = array<i64: 64, 16>}, {pipeline_mode = #tpu.pipeline_mode<synchronous>, transform_indices = @transform_4, window_bounds = array<i64: 64, 1>}, {pipeline_mode = #tpu.pipeline_mode<synchronous>, transform_indices = @transform_5, window_bounds = array<i64: 1, 64>}, {pipeline_mode = #tpu.pipeline_mode<synchronous>, transform_indices = @transform_6, window_bounds = array<i64: 1, 1>}, {transform_indices = @transform_7, window_bounds = array<i64: 2, 128>}]} {
    %c0 = arith.constant 0 : index
    %c0_0 = arith.constant 0 : index
    %0 = vector.load %arg1[%c0, %c0_0] : memref<4x128xf32, #tpu.memory_space<vmem>>, vector<4x128xf32>
    %cst = arith.constant 5.000000e-01 : f32
    %1 = vector.broadcast %cst : f32 to vector<4x128xf32>
    %2 = arith.mulf %0, %1 : vector<4x128xf32>
    %3 = math.cos %2 : vector<4x128xf32>
    %4 = math.sin %2 : vector<4x128xf32>
    %c0_1 = arith.constant 0 : index
    %c0_2 = arith.constant 0 : index
    %5 = vector.load %arg2[%c0_1, %c0_2] : memref<16x4xf32, #tpu.memory_space<vmem>>, vector<16x4xf32>
    %6 = vector.extract_strided_slice %4 {offsets = [0, 0], sizes = [1, 128], strides = [1, 1]} : vector<4x128xf32> to vector<1x128xf32>
    %7 = vector.extract_strided_slice %3 {offsets = [0, 0], sizes = [1, 128], strides = [1, 1]} : vector<4x128xf32> to vector<1x128xf32>
    %8 = arith.subf %6, %7 : vector<1x128xf32>
    %9 = vector.extract_strided_slice %3 {offsets = [0, 0], sizes = [1, 128], strides = [1, 1]} : vector<4x128xf32> to vector<1x128xf32>
    %10 = vector.extract_strided_slice %5 {offsets = [0, 0], sizes = [16, 1], strides = [1, 1]} : vector<16x4xf32> to vector<16x1xf32>
    %11 = vector.broadcast %10 : vector<16x1xf32> to vector<16x128xf32>
    %12 = vector.broadcast %8 : vector<1x128xf32> to vector<16x128xf32>
    %13 = arith.mulf %11, %12 : vector<16x128xf32>
    %14 = vector.broadcast %9 : vector<1x128xf32> to vector<16x128xf32>
    %15 = arith.addf %14, %13 : vector<16x128xf32>
    %16 = vector.extract_strided_slice %4 {offsets = [1, 0], sizes = [1, 128], strides = [1, 1]} : vector<4x128xf32> to vector<1x128xf32>
    %17 = vector.extract_strided_slice %3 {offsets = [1, 0], sizes = [1, 128], strides = [1, 1]} : vector<4x128xf32> to vector<1x128xf32>
    %18 = arith.subf %16, %17 : vector<1x128xf32>
    %19 = vector.extract_strided_slice %3 {offsets = [1, 0], sizes = [1, 128], strides = [1, 1]} : vector<4x128xf32> to vector<1x128xf32>
    %20 = vector.extract_strided_slice %5 {offsets = [0, 1], sizes = [16, 1], strides = [1, 1]} : vector<16x4xf32> to vector<16x1xf32>
    %21 = vector.broadcast %20 : vector<16x1xf32> to vector<16x128xf32>
    %22 = vector.broadcast %18 : vector<1x128xf32> to vector<16x128xf32>
    %23 = arith.mulf %21, %22 : vector<16x128xf32>
    %24 = vector.broadcast %19 : vector<1x128xf32> to vector<16x128xf32>
    %25 = arith.addf %24, %23 : vector<16x128xf32>
    %26 = arith.mulf %15, %25 : vector<16x128xf32>
    %27 = vector.extract_strided_slice %4 {offsets = [2, 0], sizes = [1, 128], strides = [1, 1]} : vector<4x128xf32> to vector<1x128xf32>
    %28 = vector.extract_strided_slice %3 {offsets = [2, 0], sizes = [1, 128], strides = [1, 1]} : vector<4x128xf32> to vector<1x128xf32>
    %29 = arith.subf %27, %28 : vector<1x128xf32>
    %30 = vector.extract_strided_slice %3 {offsets = [2, 0], sizes = [1, 128], strides = [1, 1]} : vector<4x128xf32> to vector<1x128xf32>
    %31 = vector.extract_strided_slice %5 {offsets = [0, 2], sizes = [16, 1], strides = [1, 1]} : vector<16x4xf32> to vector<16x1xf32>
    %32 = vector.broadcast %31 : vector<16x1xf32> to vector<16x128xf32>
    %33 = vector.broadcast %29 : vector<1x128xf32> to vector<16x128xf32>
    %34 = arith.mulf %32, %33 : vector<16x128xf32>
    %35 = vector.broadcast %30 : vector<1x128xf32> to vector<16x128xf32>
    %36 = arith.addf %35, %34 : vector<16x128xf32>
    %37 = arith.mulf %26, %36 : vector<16x128xf32>
    %38 = vector.extract_strided_slice %4 {offsets = [3, 0], sizes = [1, 128], strides = [1, 1]} : vector<4x128xf32> to vector<1x128xf32>
    %39 = vector.extract_strided_slice %3 {offsets = [3, 0], sizes = [1, 128], strides = [1, 1]} : vector<4x128xf32> to vector<1x128xf32>
    %40 = arith.subf %38, %39 : vector<1x128xf32>
    %41 = vector.extract_strided_slice %3 {offsets = [3, 0], sizes = [1, 128], strides = [1, 1]} : vector<4x128xf32> to vector<1x128xf32>
    %42 = vector.extract_strided_slice %5 {offsets = [0, 3], sizes = [16, 1], strides = [1, 1]} : vector<16x4xf32> to vector<16x1xf32>
    %43 = vector.broadcast %42 : vector<16x1xf32> to vector<16x128xf32>
    %44 = vector.broadcast %40 : vector<1x128xf32> to vector<16x128xf32>
    %45 = arith.mulf %43, %44 : vector<16x128xf32>
    %46 = vector.broadcast %41 : vector<1x128xf32> to vector<16x128xf32>
    %47 = arith.addf %46, %45 : vector<16x128xf32>
    %48 = arith.mulf %37, %47 : vector<16x128xf32>
    %c0_3 = arith.constant 0 : index
    %c0_4 = arith.constant 0 : index
    %49 = vector.load %arg3[%c0_3, %c0_4] : memref<32x16xf32, #tpu.memory_space<vmem>>, vector<32x16xf32>
    %cst_5 = arith.constant dense<0.000000e+00> : vector<32x128xf32>
    %50 = tpu.matmul %49, %48, %cst_5 {dimension_numbers = #tpu.dot_dimension_numbers<[1], [0], [0], [1], [0, 0, 1, 1], [], []>} : vector<32x16xf32>, vector<16x128xf32>, vector<32x128xf32> -> vector<32x128xf32>
    %51 = vector.extract_strided_slice %50 {offsets = [0, 0], sizes = [16, 128], strides = [1, 1]} : vector<32x128xf32> to vector<16x128xf32>
    %52 = vector.extract_strided_slice %50 {offsets = [16, 0], sizes = [16, 128], strides = [1, 1]} : vector<32x128xf32> to vector<16x128xf32>
    %53 = arith.mulf %51, %51 : vector<16x128xf32>
    %54 = arith.mulf %52, %52 : vector<16x128xf32>
    %55 = arith.addf %53, %54 : vector<16x128xf32>
    %c0_6 = arith.constant 0 : index
    %c0_7 = arith.constant 0 : index
    %56 = vector.load %arg4[%c0_6, %c0_7] : memref<64x16xf32, #tpu.memory_space<vmem>>, vector<64x16xf32>
    %cst_8 = arith.constant dense<0.000000e+00> : vector<64x128xf32>
    %57 = tpu.matmul %56, %55, %cst_8 {dimension_numbers = #tpu.dot_dimension_numbers<[1], [0], [0], [1], [0, 0, 1, 1], [], []>} : vector<64x16xf32>, vector<16x128xf32>, vector<64x128xf32> -> vector<64x128xf32>
    %c0_9 = arith.constant 0 : index
    %c0_10 = arith.constant 0 : index
    %58 = vector.load %arg5[%c0_9, %c0_10] : memref<64x1xf32, #tpu.memory_space<vmem>>, vector<64x1xf32>
    %59 = vector.broadcast %58 : vector<64x1xf32> to vector<64x128xf32>
    %60 = arith.addf %57, %59 : vector<64x128xf32>
    %cst_11 = arith.constant 0.000000e+00 : f32
    %61 = vector.broadcast %cst_11 : f32 to vector<64x128xf32>
    %62 = arith.maximumf %60, %61 : vector<64x128xf32>
    %c0_12 = arith.constant 0 : index
    %c0_13 = arith.constant 0 : index
    %63 = vector.load %arg6[%c0_12, %c0_13] : memref<1x64xf32, #tpu.memory_space<vmem>>, vector<1x64xf32>
    %cst_14 = arith.constant dense<0.000000e+00> : vector<1x128xf32>
    %64 = tpu.matmul %63, %62, %cst_14 {dimension_numbers = #tpu.dot_dimension_numbers<[1], [0], [0], [1], [0, 0, 1, 1], [], []>} : vector<1x64xf32>, vector<64x128xf32>, vector<1x128xf32> -> vector<1x128xf32>
    %c0_15 = arith.constant 0 : index
    %c0_16 = arith.constant 0 : index
    %65 = vector.load %arg7[%c0_15, %c0_16] : memref<1x1xf32, #tpu.memory_space<vmem>>, vector<1x1xf32>
    %66 = vector.broadcast %65 : vector<1x1xf32> to vector<1x128xf32>
    %67 = arith.addf %64, %66 : vector<1x128xf32>
    %cst_17 = arith.constant 0.000000e+00 : f32
    %68 = vector.broadcast %cst_17 : f32 to vector<1x128xf32>
    %69 = arith.maximumf %67, %68 : vector<1x128xf32>
    %70 = math.absf %67 : vector<1x128xf32>
    %cst_18 = arith.constant 0.000000e+00 : f32
    %71 = vector.broadcast %cst_18 : f32 to vector<1x128xf32>
    %72 = arith.subf %71, %70 : vector<1x128xf32>
    %73 = math.exp %72 : vector<1x128xf32>
    %cst_19 = arith.constant 1.000000e+00 : f32
    %74 = vector.broadcast %cst_19 : f32 to vector<1x128xf32>
    %75 = arith.addf %74, %73 : vector<1x128xf32>
    %76 = math.log %75 : vector<1x128xf32>
    %77 = arith.addf %69, %76 : vector<1x128xf32>
    %cst_20 = arith.constant 0.000000e+00 : f32
    %78 = vector.broadcast %cst_20 : f32 to vector<1x128xf32>
    %79 = arith.subf %78, %77 : vector<1x128xf32>
    %c0_21 = arith.constant 0 : index
    %c0_22 = arith.constant 0 : index
    %80 = vector.load %arg8[%c0_21, %c0_22] : memref<2x128xf32, #tpu.memory_space<vmem>>, vector<1x128xf32>
    tpu.vector_store %arg8[%c0_21, %c0_22], %79 {strides = array<i32>} : memref<2x128xf32, #tpu.memory_space<vmem>>, vector<1x128xf32>,
    %81 = arith.subf %67, %77 : vector<1x128xf32>
    %c1 = arith.constant 1 : index
    %c0_23 = arith.constant 0 : index
    %82 = vector.load %arg8[%c1, %c0_23] : memref<2x128xf32, #tpu.memory_space<vmem>>, vector<1x128xf32>
    tpu.vector_store %arg8[%c1, %c0_23], %81 {strides = array<i32>} : memref<2x128xf32, #tpu.memory_space<vmem>>, vector<1x128xf32>,
    return
  }
  func.func @transform_0(%arg0: i32) -> (i32, i32) {
    %c0_i32 = arith.constant 0 : i32
    %c0_i32_0 = arith.constant 0 : i32
    return %c0_i32, %arg0 : i32, i32
  }
  func.func @transform_1(%arg0: i32) -> (i32, i32) {
    %c0_i32 = arith.constant 0 : i32
    %c0_i32_0 = arith.constant 0 : i32
    %c0_i32_1 = arith.constant 0 : i32
    return %c0_i32, %c0_i32_0 : i32, i32
  }
  func.func @transform_2(%arg0: i32) -> (i32, i32) {
    %c0_i32 = arith.constant 0 : i32
    %c0_i32_0 = arith.constant 0 : i32
    %c0_i32_1 = arith.constant 0 : i32
    return %c0_i32, %c0_i32_0 : i32, i32
  }
  func.func @transform_3(%arg0: i32) -> (i32, i32) {
    %c0_i32 = arith.constant 0 : i32
    %c0_i32_0 = arith.constant 0 : i32
    %c0_i32_1 = arith.constant 0 : i32
    return %c0_i32, %c0_i32_0 : i32, i32
  }
  func.func @transform_4(%arg0: i32) -> (i32, i32) {
    %c0_i32 = arith.constant 0 : i32
    %c0_i32_0 = arith.constant 0 : i32
    %c0_i32_1 = arith.constant 0 : i32
    return %c0_i32, %c0_i32_0 : i32, i32
  }
  func.func @transform_5(%arg0: i32) -> (i32, i32) {
    %c0_i32 = arith.constant 0 : i32
    %c0_i32_0 = arith.constant 0 : i32
    %c0_i32_1 = arith.constant 0 : i32
    return %c0_i32, %c0_i32_0 : i32, i32
  }
  func.func @transform_6(%arg0: i32) -> (i32, i32) {
    %c0_i32 = arith.constant 0 : i32
    %c0_i32_0 = arith.constant 0 : i32
    %c0_i32_1 = arith.constant 0 : i32
    return %c0_i32, %c0_i32_0 : i32, i32
  }
  func.func @transform_7(%arg0: i32) -> (i32, i32) {
    %c0_i32 = arith.constant 0 : i32
    %c0_i32_0 = arith.constant 0 : i32
    return %c0_i32, %arg0 : i32, i32
  }
}

</mosaic_0001>

<llo_original>
// kernel: tpu_custom_call.1
$region0: #{tpu_custom_call.1}
  #allocation0 [shape = 'u32[]', space=smem, size = 0x4, offset = 0x4, fixed_abs, tag = 'smem constant byte address 0x4 - core index']
  #allocation1 [shape = 'u32[144,128]{1,0:T(1,128)}', space=vmem, size = 0x12000, scoped, tag = 'internal scratch']
  #allocation2 [shape = 'f32[1,1]{1,0:T(1,128)S(1)}', space=vmem, size = 0x200, scoped, tag = 'scoped memory for tpu_custom_call.1']
  %s0 = inlined_call_operand.vmem [shape: f32[4,128], index: 0, kind: input, shape index: {}]
  %s1 = inlined_call_operand.vmem [shape: f32[16,4], index: 1, kind: input, shape index: {}]
  %s2 = inlined_call_operand.vmem [shape: f32[32,16], index: 2, kind: input, shape index: {}]
  %s3 = inlined_call_operand.vmem [shape: f32[64,16], index: 3, kind: input, shape index: {}]
  %s4 = inlined_call_operand.vmem [shape: f32[64,1], index: 4, kind: input, shape index: {}]
  %s5 = inlined_call_operand.vmem [shape: f32[1,64], index: 5, kind: input, shape index: {}]
  %s6 = inlined_call_operand.<no memory space> [shape: f32[1,1], index: 6, kind: input, shape index: {}]
  %s7 = inlined_call_operand.hbm [shape: f32[2,128], index: 7, kind: output, shape index: {}]
  %s8 = sld [smem:[#allocation0]]
  $region38: #{tpu_custom_call.1} parent=0
    _
  %s10 = ssub.s32 1, %s8
  %s11 = scalar_select 0, %s10, %s8
  %v12 = vstv %s6
  %13 = vst [vmem:[#allocation2] sm:$0x1] %v12
  $region1: #{tpu_custom_call.1} parent=0
    #allocation3 [shape = 'u8[1024]{0}', space=vmem, size = 0x400, scoped, tag = 'output window, operand 0, single buffered']
    #allocation4 [shape = 's32[1]{0}', space=sflag, size = 0x4, scoped, tag = 'scoped memory for tpu_custom_call.1']
    %14 = vsyncpa [#allocation4], 0
    // Predicated region
    $region2: #{tpu_custom_call.1} parent=1 // pred_check
      _
    $region3: #{tpu_custom_call.1} parent=1 // pred_check_branch
      %16 = sbr.rel (0) target = $region5
    $region4: #{tpu_custom_call.1} parent=1 // pred_region
      _
    $region5: #{tpu_custom_call.1} parent=1 // pred_fallthru
      _
    // Predicated region
    $region6: #{tpu_custom_call.1} parent=1 // pred_check
      _
    $region7: #{tpu_custom_call.1} parent=1 // pred_check_branch
      %18 = sbr.rel (0) target = $region9
    $region8: #{tpu_custom_call.1} parent=1 // pred_region
      _
    $region9: #{tpu_custom_call.1} parent=1 // pred_fallthru
      _
    // Predicated region
    $region10: #{tpu_custom_call.1} parent=1 // pred_check
      _
    $region11: #{tpu_custom_call.1} parent=1 // pred_check_branch
      %20 = sbr.rel (0) target = $region13
    $region12: #{tpu_custom_call.1} parent=1 // pred_region
      _
    $region13: #{tpu_custom_call.1} parent=1 // pred_fallthru
      _
    // Predicated region
    $region14: #{tpu_custom_call.1} parent=1 // pred_check
      _
    $region15: #{tpu_custom_call.1} parent=1 // pred_check_branch
      %22 = sbr.rel (0) target = $region17
    $region16: #{tpu_custom_call.1} parent=1 // pred_region
      _
    $region17: #{tpu_custom_call.1} parent=1 // pred_fallthru
      _
    // Predicated region
    $region18: #{tpu_custom_call.1} parent=1 // pred_check
      _
    $region19: #{tpu_custom_call.1} parent=1 // pred_check_branch
      %24 = sbr.rel (0) target = $region21
    $region20: #{tpu_custom_call.1} parent=1 // pred_region
      _
    $region21: #{tpu_custom_call.1} parent=1 // pred_fallthru
      _
    // Predicated region
    $region22: #{tpu_custom_call.1} parent=1 // pred_check
      _
    $region23: #{tpu_custom_call.1} parent=1 // pred_check_branch
      %26 = sbr.rel (0) target = $region25
    $region24: #{tpu_custom_call.1} parent=1 // pred_region
      _
    $region25: #{tpu_custom_call.1} parent=1 // pred_fallthru
      _
    // Predicated region
    $region26: #{tpu_custom_call.1} parent=1 // pred_check
      _
    $region27: #{tpu_custom_call.1} parent=1 // pred_check_branch
      %28 = sbr.rel (0) target = $region29
    $region28: #{tpu_custom_call.1} parent=1 // pred_region
      _
    $region29: #{tpu_custom_call.1} parent=1 // pred_fallthru
      _
    %v29 = vld [vmem:[%s0] sm:$0xf]
    %v30 = vmul.f32 %v29, 0.5
    %v31 = vand.u32 2147483647, %v30
    %vm32 = vcmp.le.f32.partialorder %v31, 0.7853982
    %vm33 = vcmp.lt.s32.totalorder %v30, 0
    %v34 = vand.u32 %v30, 2139095040
    %v35 = vshrl.u32 %v34, 23
    %v36 = vsub.s32 %v35, 127
    %v37 = vand.u32 2147483647, %v30
    %v38 = vand.u32 %v37, 8388607
    %v39 = vor.u32 %v38, 8388608
    %v40 = vsub.s32 0, %v39
    %v41 = vadd.s32 %v36, 1
    %vm42 = vcmp.gt.s32.totalorder %v41, 0
    %v43 = vsel %vm42, %v41, 0
    %v44 = vshrl.u32 %v43, 5
    %v45 = vand.u32 %v43, 31
    %v46 = vsub.s32 32, %v45
    %v47 = vshrl.u32 683565275, %v46
    %v48 = vshll.u32 683565275, %v45
    %v49 = vshrl.u32 2475754826, %v46
    %v50 = vor.u32 %v48, %v49
    %v51 = vshll.u32 2475754826, %v45
    %v52 = vshrl.u32 2131351028, %v46
    %v53 = vor.u32 %v51, %v52
    %v54 = vshll.u32 2131351028, %v45
    %v55 = vshrl.u32 2102212464, %v46
    %v56 = vor.u32 %v54, %v55
    %v57 = vshll.u32 2102212464, %v45
    %v58 = vshrl.u32 920167782, %v46
    %v59 = vor.u32 %v57, %v58
    %v60 = vshll.u32 920167782, %v45
    %v61 = vshrl.u32 1326507024, %v46
    %v62 = vor.u32 %v60, %v61
    %vm63 = vcmp.lt.s32.totalorder %v44, 1
    %vm64 = vcmp.lt.s32.totalorder %v44, 2
    %vm65 = vcmp.lt.s32.totalorder %v44, 3
    %vm66 = vcmp.lt.s32.totalorder %v44, 4
    %v67 = vsel %vm63, %v47, %v50
    %v68 = vsel %vm66, %v56, 2102212464
    %v69 = vsel %vm65, %v53, %v68
    %v70 = vsel %vm64, %v67, %v69
    %v71 = vsel %vm63, %v50, %v53
    %v72 = vsel %vm66, %v59, 920167782
    %v73 = vsel %vm65, %v56, %v72
    %v74 = vsel %vm64, %v71, %v73
    %v75 = vsel %vm63, %v53, %v56
    %v76 = vsel %vm66, %v62, 1326507024
    %v77 = vsel %vm65, %v59, %v76
    %v78 = vsel %vm64, %v75, %v77
    %v79 = vshll.u32 %v39, 8
    %v80 = vmul.u32.u64.compose %v79, %v78
    %v81 = vextract.low.u32 %v80
    %v82 = vextract.high.u32 %v80
    %v83 = vmul.u32.u64.compose %v79, %v74
    %v84 = vextract.low.u32 %v83
    %v85 = vextract.high.u32 %v83
    %v86 = vmul.u32 %v79, %v70
    %v87 = vadd.s32 %v82, %v84
    %vm88 = vc.u32 %v82, %v84
    %v89 = vadd.s32 %v85, 1
    %v90 = vsel %vm88, %v89, %v85
    %v91 = vadd.s32 %v86, %v90
    %v92 = vadd.s32 %v91, 536870912
    %v93 = vshrl.u32 %v92, 30
    %v94 = vshll.u32 %v93, 30
    %v95 = vsub.s32 %v91, %v94
    %vm96 = vcmp.lt.s32.totalorder %v95, 0
    %v97 = vsub.s32 0, %v95
    %v98 = vsel %vm96, %v97, %v95
    %v99 = vclz %v98
    %v100 = vsub.s32 %v99, 2
    %vm101 = vcmp.gt.s32.totalorder 0, %v100
    %v102 = vsel %vm101, 0, %v100
    %v103 = vsub.s32 32, %v102
    %v104 = vshll.u32 %v95, %v102
    %v105 = vshrl.u32 %v87, %v103
    %v106 = vor.u32 %v104, %v105
    %v107 = vsub.s32 4294967266, %v102
    %v108 = vadd.s32 %v107, 127
    %v109 = vshll.u32 %v108, 23
    %v110 = vor.u32 4788187, %v109
    %v111 = vand.u32 2147483647, %v110
    %v113 = vcvt.s32.f32 %v106
    %v114 = vmul.f32 %v113, %v111
    %v115 = vxor.u32 %v114, 2147483648
    %v116 = vsel %vm33, %v115, %v114
    %v117 = vsub.s32 4, %v93
    %v118 = vsel %vm33, %v117, %v93
    %v119 = vsel %vm32, %v30, %v116
    %v120 = vsel %vm32, 0, %v118
    %v121 = vcosq.f32.pop %v119
    %v122 = vsinq.f32.pop %v119
    %vm123 = vweird.f32 %v30
    %v124 = vand.u32 %v120, 3
    %vm125 = vcmp.lt.s32.totalorder %v124, 2
    %vm126 = vcmp.eq.s32.totalorder %v124, 0
    %v127 = vxor.u32 %v122, 2147483648
    %v128 = vsel %vm126, %v121, %v127
    %vm129 = vcmp.eq.s32.totalorder %v124, 2
    %v130 = vxor.u32 %v121, 2147483648
    %v131 = vsel %vm129, %v130, %v122
    %v132 = vsel %vm125, %v128, %v131
    %v133 = vsel %vm123, nan, %v132
    %v134 = vand.u32 2147483647, %v30
    %vm135 = vcmp.le.f32.partialorder %v134, 0.7853982
    %vm136 = vcmp.lt.s32.totalorder %v30, 0
    %v137 = vand.u32 %v30, 2139095040
    %v138 = vshrl.u32 %v137, 23
    %v139 = vsub.s32 %v138, 127
    %v140 = vand.u32 2147483647, %v30
    %v141 = vand.u32 %v140, 8388607
    %v142 = vor.u32 %v141, 8388608
    %v143 = vsub.s32 0, %v142
    %v144 = vadd.s32 %v139, 1
    %vm145 = vcmp.gt.s32.totalorder %v144, 0
    %v146 = vsel %vm145, %v144, 0
    %v147 = vshrl.u32 %v146, 5
    %v148 = vand.u32 %v146, 31
    %v149 = vsub.s32 32, %v148
    %v150 = vshrl.u32 683565275, %v149
    %v151 = vshll.u32 683565275, %v148
    %v152 = vshrl.u32 2475754826, %v149
    %v153 = vor.u32 %v151, %v152
    %v154 = vshll.u32 2475754826, %v148
    %v155 = vshrl.u32 2131351028, %v149
    %v156 = vor.u32 %v154, %v155
    %v157 = vshll.u32 2131351028, %v148
    %v158 = vshrl.u32 2102212464, %v149
    %v159 = vor.u32 %v157, %v158
    %v160 = vshll.u32 2102212464, %v148
    %v161 = vshrl.u32 920167782, %v149
    %v162 = vor.u32 %v160, %v161
    %v163 = vshll.u32 920167782, %v148
    %v164 = vshrl.u32 1326507024, %v149
    %v165 = vor.u32 %v163, %v164
    %vm166 = vcmp.lt.s32.totalorder %v147, 1
    %vm167 = vcmp.lt.s32.totalorder %v147, 2
    %vm168 = vcmp.lt.s32.totalorder %v147, 3
    %vm169 = vcmp.lt.s32.totalorder %v147, 4
    %v170 = vsel %vm166, %v150, %v153
    %v171 = vsel %vm169, %v159, 2102212464
    %v172 = vsel %vm168, %v156, %v171
    %v173 = vsel %vm167, %v170, %v172
    %v174 = vsel %vm166, %v153, %v156
    %v175 = vsel %vm169, %v162, 920167782
    %v176 = vsel %vm168, %v159, %v175
    %v177 = vsel %vm167, %v174, %v176
    %v178 = vsel %vm166, %v156, %v159
    %v179 = vsel %vm169, %v165, 1326507024
    %v180 = vsel %vm168, %v162, %v179
    %v181 = vsel %vm167, %v178, %v180
    %v182 = vshll.u32 %v142, 8
    %v183 = vmul.u32.u64.compose %v182, %v181
    %v184 = vextract.low.u32 %v183
    %v185 = vextract.high.u32 %v183
    %v186 = vmul.u32.u64.compose %v182, %v177
    %v187 = vextract.low.u32 %v186
    %v188 = vextract.high.u32 %v186
    %v189 = vmul.u32 %v182, %v173
    %v190 = vadd.s32 %v185, %v187
    %vm191 = vc.u32 %v185, %v187
    %v192 = vadd.s32 %v188, 1
    %v193 = vsel %vm191, %v192, %v188
    %v194 = vadd.s32 %v189, %v193
    %v195 = vadd.s32 %v194, 536870912
    %v196 = vshrl.u32 %v195, 30
    %v197 = vshll.u32 %v196, 30
    %v198 = vsub.s32 %v194, %v197
    %vm199 = vcmp.lt.s32.totalorder %v198, 0
    %v200 = vsub.s32 0, %v198
    %v201 = vsel %vm199, %v200, %v198
    %v202 = vclz %v201
    %v203 = vsub.s32 %v202, 2
    %vm204 = vcmp.gt.s32.totalorder 0, %v203
    %v205 = vsel %vm204, 0, %v203
    %v206 = vsub.s32 32, %v205
    %v207 = vshll.u32 %v198, %v205
    %v208 = vshrl.u32 %v190, %v206
    %v209 = vor.u32 %v207, %v208
    %v210 = vsub.s32 4294967266, %v205
    %v211 = vadd.s32 %v210, 127
    %v212 = vshll.u32 %v211, 23
    %v213 = vor.u32 4788187, %v212
    %v214 = vand.u32 2147483647, %v213
    %v216 = vcvt.s32.f32 %v209
    %v217 = vmul.f32 %v216, %v214
    %v218 = vxor.u32 %v217, 2147483648
    %v219 = vsel %vm136, %v218, %v217
    %v220 = vsub.s32 4, %v196
    %v221 = vsel %vm136, %v220, %v196
    %v222 = vsel %vm135, %v30, %v219
    %v223 = vsel %vm135, 0, %v221
    %v224 = vcosq.f32.pop %v222
    %v225 = vsinq.f32.pop %v222
    %vm226 = vweird.f32 %v30
    %v227 = vadd.s32 %v223, 3
    %v228 = vand.u32 %v227, 3
    %vm229 = vcmp.lt.s32.totalorder %v228, 2
    %vm230 = vcmp.eq.s32.totalorder %v228, 0
    %v231 = vxor.u32 %v225, 2147483648
    %v232 = vsel %vm230, %v224, %v231
    %vm233 = vcmp.eq.s32.totalorder %v228, 2
    %v234 = vxor.u32 %v224, 2147483648
    %v235 = vsel %vm233, %v234, %v225
    %v236 = vsel %vm229, %v232, %v235
    %v237 = vsel %vm226, nan, %v236
    %v238 = vld [vmem:[%s1] sm:$0xff]
    %v239 = vld [vmem:[%s1 + $0x8] sm:$0xff]
    %v240 = vsub.f32 %v237, %v133
    %242 = vset.pattern.permute.xlu0 0
    %243 = vperm.xlu0 %242, %v238
    %v244 = vpop.permute.xlu0 %243
    %247 = vset.pattern.permute.xlu0 0
    %248 = vperm.xlu0 %247, %v239
    %v249 = vpop.permute.xlu0 %248
    %v251 = vlaneseq
    %v252 = vshrl.u32 %v251, 7
    %v253 = vsub.s32 0, %v252
    %v254 = vrot.slane %v240, %v253
    %v255 = vmul.f32 %v244, %v254
    %v256 = vmul.f32 %v249, %v254
    %v257 = vlaneseq
    %v258 = vshrl.u32 %v257, 7
    %v259 = vsub.s32 0, %v258
    %v260 = vrot.slane %v133, %v259
    %v261 = vadd.f32 %v260, %v255
    %v262 = vadd.f32 %v260, %v256
    %263 = vset.pattern.permute.xlu0 1
    %264 = vperm.xlu0 %263, %v238
    %v265 = vpop.permute.xlu0 %264
    %267 = vset.pattern.permute.xlu0 1
    %268 = vperm.xlu0 %267, %v239
    %v269 = vpop.permute.xlu0 %268
    %v271 = vlaneseq
    %v272 = vshrl.u32 %v271, 7
    %v273 = vsub.s32 1, %v272
    %v274 = vrot.slane %v240, %v273
    %v275 = vmul.f32 %v265, %v274
    %v276 = vmul.f32 %v269, %v274
    %v277 = vlaneseq
    %v278 = vshrl.u32 %v277, 7
    %v279 = vsub.s32 1, %v278
    %v280 = vrot.slane %v133, %v279
    %v281 = vadd.f32 %v280, %v275
    %v282 = vadd.f32 %v280, %v276
    %v283 = vmul.f32 %v261, %v281
    %v284 = vmul.f32 %v262, %v282
    %285 = vset.pattern.permute.xlu0 2
    %286 = vperm.xlu0 %285, %v238
    %v287 = vpop.permute.xlu0 %286
    %289 = vset.pattern.permute.xlu0 2
    %290 = vperm.xlu0 %289, %v239
    %v291 = vpop.permute.xlu0 %290
    %v293 = vlaneseq
    %v294 = vshrl.u32 %v293, 7
    %v295 = vsub.s32 2, %v294
    %v296 = vrot.slane %v240, %v295
    %v297 = vmul.f32 %v287, %v296
    %v298 = vmul.f32 %v291, %v296
    %v299 = vlaneseq
    %v300 = vshrl.u32 %v299, 7
    %v301 = vsub.s32 2, %v300
    %v302 = vrot.slane %v133, %v301
    %v303 = vadd.f32 %v302, %v297
    %v304 = vadd.f32 %v302, %v298
    %v305 = vmul.f32 %v283, %v303
    %v306 = vmul.f32 %v284, %v304
    %307 = vset.pattern.permute.xlu0 3
    %308 = vperm.xlu0 %307, %v238
    %v309 = vpop.permute.xlu0 %308
    %311 = vset.pattern.permute.xlu0 3
    %312 = vperm.xlu0 %311, %v239
    %v313 = vpop.permute.xlu0 %312
    %v315 = vlaneseq
    %v316 = vshrl.u32 %v315, 7
    %v317 = vsub.s32 3, %v316
    %v318 = vrot.slane %v240, %v317
    %v319 = vmul.f32 %v309, %v318
    %v320 = vmul.f32 %v313, %v318
    %v321 = vlaneseq
    %v322 = vshrl.u32 %v321, 7
    %v323 = vsub.s32 3, %v322
    %v324 = vrot.slane %v133, %v323
    %v325 = vadd.f32 %v324, %v319
    %v326 = vadd.f32 %v324, %v320
    %v327 = vmul.f32 %v305, %v325
    %v328 = vmul.f32 %v306, %v326
    %v329 = vld [vmem:[%s2] sm:$0xff]
    %v330 = vld [vmem:[%s2 + $0x8] sm:$0xff]
    %v331 = vld [vmem:[%s2 + $0x10] sm:$0xff]
    %v332 = vld [vmem:[%s2 + $0x18] sm:$0xff]
    %vm333 = vcmask 130048
    %v335 = vsel %vm333, %v329, 0
    %v338 = vsel %vm333, %v330, 0
    %v341 = vsel %vm333, %v331, 0
    %v344 = vsel %vm333, %v332, 0
    %346 = vmatprep.subr.mxu0 0.0
    %347 = vmatpush1.msra.mxu0 %v327
    %348 = vmatprep.subr.mxu0 0.0
    %349 = vmatpush1.msra.mxu0 %v328
    %350 = vmatprep.subr.mxu0 0.0
    %351 = vmatpush1.msra.mxu0 0.0
    %352 = vmatprep.subr.mxu0 0.0
    %353 = vmatpush1.msra.mxu0 0.0
    %354 = vmatprep.subr.mxu0 0.0
    %355 = vmatpush1.msra.mxu0 0.0
    %356 = vmatprep.subr.mxu0 0.0
    %357 = vmatpush1.msra.mxu0 0.0
    %358 = vmatprep.subr.mxu0 0.0
    %359 = vmatpush1.msra.mxu0 0.0
    %360 = vmatprep.subr.mxu0 0.0
    %361 = vmatpush1.msra.mxu0 0.0
    %362 = vmatprep.subr.mxu0 0.0
    %363 = vmatpush1.msra.mxu0 0.0
    %364 = vmatprep.subr.mxu0 0.0
    %365 = vmatpush1.msra.mxu0 0.0
    %366 = vmatprep.subr.mxu0 0.0
    %367 = vmatpush1.msra.mxu0 0.0
    %368 = vmatprep.subr.mxu0 0.0
    %369 = vmatpush1.msra.mxu0 0.0
    %370 = vmatprep.subr.mxu0 0.0
    %371 = vmatpush1.msra.mxu0 0.0
    %372 = vmatprep.subr.mxu0 0.0
    %373 = vmatpush1.msra.mxu0 0.0
    %374 = vmatprep.subr.mxu0 0.0
    %375 = vmatpush1.msra.mxu0 0.0
    %376 = vmatprep.subr.mxu0 0.0
    %377 = vmatpush1.msra.mxu0 0.0
    %378 = vmatprep.subr.mxu0 0.0
    %379 = vmatpush1.msra.mxu0 0.0
    %380 = vmatprep.subr.mxu0 0.0
    %381 = vmatpush1.msra.mxu0 0.0
    %382 = vmatprep.subr.mxu0 0.0
    %383 = vmatpush1.msra.mxu0 0.0
    %384 = vmatprep.subr.mxu0 0.0
    %385 = vmatpush1.msra.mxu0 0.0
    %386 = vmatprep.subr.mxu0 0.0
    %387 = vmatpush1.msra.mxu0 0.0
    %388 = vmatprep.subr.mxu0 0.0
    %389 = vmatpush1.msra.mxu0 0.0
    %390 = vmatprep.subr.mxu0 0.0
    %391 = vmatpush1.msra.mxu0 0.0
    %392 = vmatprep.subr.mxu0 0.0
    %393 = vmatpush1.msra.mxu0 0.0
    %394 = vmatprep.subr.mxu0 0.0
    %395 = vmatpush1.msra.mxu0 0.0
    %396 = vmatprep.subr.mxu0 0.0
    %397 = vmatpush1.msra.mxu0 0.0
    %398 = vmatprep.subr.mxu0 0.0
    %399 = vmatpush1.msra.mxu0 0.0
    %400 = vmatprep.subr.mxu0 0.0
    %401 = vmatpush1.msra.mxu0 0.0
    %402 = vmatprep.subr.mxu0 0.0
    %403 = vmatpush1.msra.mxu0 0.0
    %404 = vmatprep.subr.mxu0 0.0
    %405 = vmatpush1.msra.mxu0 0.0
    %406 = vmatprep.subr.mxu0 0.0
    %407 = vmatpush1.msra.mxu0 0.0
    %408 = vmatprep.subr.mxu0 0.0
    %409 = vmatpush1.msra.mxu0 0.0
    %410 = vmatprep.mubr.f32.mxu0 0.0
    %411 = vmatmul.mubr.f32.gmra.mrb[0].mxu0 %v335
    %v412 = vpop.f32.mrb[0].mxu0
    %v413 = vadd.f32 0.0, %v412
    %v414 = vpop.f32.mrb[0].mxu0
    %415 = vmatprep.mubr.f32.mxu0 0.0
    %416 = vmatmul.mubr.f32.gmra.mrb[0].mxu0 %v338
    %v417 = vpop.f32.mrb[0].mxu0
    %v418 = vadd.f32 0.0, %v417
    %v419 = vpop.f32.mrb[0].mxu0
    %420 = vmatprep.mubr.f32.mxu0 0.0
    %421 = vmatmul.mubr.f32.gmra.mrb[0].mxu0 %v341
    %v422 = vpop.f32.mrb[0].mxu0
    %v423 = vadd.f32 0.0, %v422
    %v424 = vpop.f32.mrb[0].mxu0
    %425 = vmatprep.mubr.f32.mxu0 0.0
    %426 = vmatmul.mubr.f32.gmra.mrb[0].mxu0 %v344
    %v427 = vpop.f32.mrb[0].mxu0
    %v428 = vadd.f32 0.0, %v427
    %v429 = vpop.f32.mrb[0].mxu0
    %430 = vdwg.mxu0
    %v431 = vmul.f32 %v413, %v413
    %v432 = vmul.f32 %v418, %v418
    %v433 = vmul.f32 %v423, %v423
    %v434 = vmul.f32 %v428, %v428
    %v435 = vadd.f32 %v431, %v433
    %v436 = vadd.f32 %v432, %v434
    %v437 = vld [vmem:[%s3] sm:$0xff]
    %v438 = vld [vmem:[%s3 + $0x8] sm:$0xff]
    %v439 = vld [vmem:[%s3 + $0x10] sm:$0xff]
    %v440 = vld [vmem:[%s3 + $0x18] sm:$0xff]
    %v441 = vld [vmem:[%s3 + $0x20] sm:$0xff]
    %v442 = vld [vmem:[%s3 + $0x28] sm:$0xff]
    %v443 = vld [vmem:[%s3 + $0x30] sm:$0xff]
    %v444 = vld [vmem:[%s3 + $0x38] sm:$0xff]
    %v445 = vld [vmem:[%s4] sm:$0xff]
    %v446 = vld [vmem:[%s4 + $0x8] sm:$0xff]
    %v447 = vld [vmem:[%s4 + $0x10] sm:$0xff]
    %v448 = vld [vmem:[%s4 + $0x18] sm:$0xff]
    %v449 = vld [vmem:[%s4 + $0x20] sm:$0xff]
    %v450 = vld [vmem:[%s4 + $0x28] sm:$0xff]
    %v451 = vld [vmem:[%s4 + $0x30] sm:$0xff]
    %v452 = vld [vmem:[%s4 + $0x38] sm:$0xff]
    %454 = vset.pattern.permute.xlu0 0
    %455 = vperm.xlu0 %454, %v445
    %v456 = vpop.permute.xlu0 %455
    %459 = vset.pattern.permute.xlu0 0
    %460 = vperm.xlu0 %459, %v446
    %v461 = vpop.permute.xlu0 %460
    %464 = vset.pattern.permute.xlu0 0
    %465 = vperm.xlu0 %464, %v447
    %v466 = vpop.permute.xlu0 %465
    %469 = vset.pattern.permute.xlu0 0
    %470 = vperm.xlu0 %469, %v448
    %v471 = vpop.permute.xlu0 %470
    %474 = vset.pattern.permute.xlu0 0
    %475 = vperm.xlu0 %474, %v449
    %v476 = vpop.permute.xlu0 %475
    %479 = vset.pattern.permute.xlu0 0
    %480 = vperm.xlu0 %479, %v450
    %v481 = vpop.permute.xlu0 %480
    %484 = vset.pattern.permute.xlu0 0
    %485 = vperm.xlu0 %484, %v451
    %v486 = vpop.permute.xlu0 %485
    %489 = vset.pattern.permute.xlu0 0
    %490 = vperm.xlu0 %489, %v452
    %v491 = vpop.permute.xlu0 %490
    %v494 = vsel %vm333, %v437, 0
    %v497 = vsel %vm333, %v438, 0
    %v500 = vsel %vm333, %v439, 0
    %v503 = vsel %vm333, %v440, 0
    %v506 = vsel %vm333, %v441, 0
    %v509 = vsel %vm333, %v442, 0
    %v512 = vsel %vm333, %v443, 0
    %v515 = vsel %vm333, %v444, 0
    %517 = vmatprep.subr.mxu0 0.0
    %518 = vmatpush1.msra.mxu0 %v435
    %519 = vmatprep.subr.mxu0 0.0
    %520 = vmatpush1.msra.mxu0 %v436
    %521 = vmatprep.subr.mxu0 0.0
    %522 = vmatpush1.msra.mxu0 0.0
    %523 = vmatprep.subr.mxu0 0.0
    %524 = vmatpush1.msra.mxu0 0.0
    %525 = vmatprep.subr.mxu0 0.0
    %526 = vmatpush1.msra.mxu0 0.0
    %527 = vmatprep.subr.mxu0 0.0
    %528 = vmatpush1.msra.mxu0 0.0
    %529 = vmatprep.subr.mxu0 0.0
    %530 = vmatpush1.msra.mxu0 0.0
    %531 = vmatprep.subr.mxu0 0.0
    %532 = vmatpush1.msra.mxu0 0.0
    %533 = vmatprep.subr.mxu0 0.0
    %534 = vmatpush1.msra.mxu0 0.0
    %535 = vmatprep.subr.mxu0 0.0
    %536 = vmatpush1.msra.mxu0 0.0
    %537 = vmatprep.subr.mxu0 0.0
    %538 = vmatpush1.msra.mxu0 0.0
    %539 = vmatprep.subr.mxu0 0.0
    %540 = vmatpush1.msra.mxu0 0.0
    %541 = vmatprep.subr.mxu0 0.0
    %542 = vmatpush1.msra.mxu0 0.0
    %543 = vmatprep.subr.mxu0 0.0
    %544 = vmatpush1.msra.mxu0 0.0
    %545 = vmatprep.subr.mxu0 0.0
    %546 = vmatpush1.msra.mxu0 0.0
    %547 = vmatprep.subr.mxu0 0.0
    %548 = vmatpush1.msra.mxu0 0.0
    %549 = vmatprep.subr.mxu0 0.0
    %550 = vmatpush1.msra.mxu0 0.0
    %551 = vmatprep.subr.mxu0 0.0
    %552 = vmatpush1.msra.mxu0 0.0
    %553 = vmatprep.subr.mxu0 0.0
    %554 = vmatpush1.msra.mxu0 0.0
    %555 = vmatprep.subr.mxu0 0.0
    %556 = vmatpush1.msra.mxu0 0.0
    %557 = vmatprep.subr.mxu0 0.0
    %558 = vmatpush1.msra.mxu0 0.0
    %559 = vmatprep.subr.mxu0 0.0
    %560 = vmatpush1.msra.mxu0 0.0
    %561 = vmatprep.subr.mxu0 0.0
    %562 = vmatpush1.msra.mxu0 0.0
    %563 = vmatprep.subr.mxu0 0.0
    %564 = vmatpush1.msra.mxu0 0.0
    %565 = vmatprep.subr.mxu0 0.0
    %566 = vmatpush1.msra.mxu0 0.0
    %567 = vmatprep.subr.mxu0 0.0
    %568 = vmatpush1.msra.mxu0 0.0
    %569 = vmatprep.subr.mxu0 0.0
    %570 = vmatpush1.msra.mxu0 0.0
    %571 = vmatprep.subr.mxu0 0.0
    %572 = vmatpush1.msra.mxu0 0.0
    %573 = vmatprep.subr.mxu0 0.0
    %574 = vmatpush1.msra.mxu0 0.0
    %575 = vmatprep.subr.mxu0 0.0
    %576 = vmatpush1.msra.mxu0 0.0
    %577 = vmatprep.subr.mxu0 0.0
    %578 = vmatpush1.msra.mxu0 0.0
    %579 = vmatprep.subr.mxu0 0.0
    %580 = vmatpush1.msra.mxu0 0.0
    %581 = vmatprep.mubr.f32.mxu0 0.0
    %582 = vmatmul.mubr.f32.gmra.mrb[0].mxu0 %v494
    %v583 = vpop.f32.mrb[0].mxu0
    %v584 = vadd.f32 %v456, %v583
    %v585 = vpop.f32.mrb[0].mxu0
    %586 = vmatprep.mubr.f32.mxu0 0.0
    %587 = vmatmul.mubr.f32.gmra.mrb[0].mxu0 %v497
    %v588 = vpop.f32.mrb[0].mxu0
    %v589 = vadd.f32 %v461, %v588
    %v590 = vpop.f32.mrb[0].mxu0
    %591 = vmatprep.mubr.f32.mxu0 0.0
    %592 = vmatmul.mubr.f32.gmra.mrb[0].mxu0 %v500
    %v593 = vpop.f32.mrb[0].mxu0
    %v594 = vadd.f32 %v466, %v593
    %v595 = vpop.f32.mrb[0].mxu0
    %596 = vmatprep.mubr.f32.mxu0 0.0
    %597 = vmatmul.mubr.f32.gmra.mrb[0].mxu0 %v503
    %v598 = vpop.f32.mrb[0].mxu0
    %v599 = vadd.f32 %v471, %v598
    %v600 = vpop.f32.mrb[0].mxu0
    %601 = vmatprep.mubr.f32.mxu0 0.0
    %602 = vmatmul.mubr.f32.gmra.mrb[0].mxu0 %v506
    %v603 = vpop.f32.mrb[0].mxu0
    %v604 = vadd.f32 %v476, %v603
    %v605 = vpop.f32.mrb[0].mxu0
    %606 = vmatprep.mubr.f32.mxu0 0.0
    %607 = vmatmul.mubr.f32.gmra.mrb[0].mxu0 %v509
    %v608 = vpop.f32.mrb[0].mxu0
    %v609 = vadd.f32 %v481, %v608
    %v610 = vpop.f32.mrb[0].mxu0
    %611 = vmatprep.mubr.f32.mxu0 0.0
    %612 = vmatmul.mubr.f32.gmra.mrb[0].mxu0 %v512
    %v613 = vpop.f32.mrb[0].mxu0
    %v614 = vadd.f32 %v486, %v613
    %v615 = vpop.f32.mrb[0].mxu0
    %616 = vmatprep.mubr.f32.mxu0 0.0
    %617 = vmatmul.mubr.f32.gmra.mrb[0].mxu0 %v515
    %v618 = vpop.f32.mrb[0].mxu0
    %v619 = vadd.f32 %v491, %v618
    %v620 = vpop.f32.mrb[0].mxu0
    %621 = vdwg.mxu0
    %v622 = vmax.f32 %v584, 0.0
    %v623 = vmax.f32 %v589, 0.0
    %v624 = vmax.f32 %v594, 0.0
    %v625 = vmax.f32 %v599, 0.0
    %v626 = vmax.f32 %v604, 0.0
    %v627 = vmax.f32 %v609, 0.0
    %v628 = vmax.f32 %v614, 0.0
    %v629 = vmax.f32 %v619, 0.0
    %v630 = vld [vmem:[%s5] sm:$0x1]
    %v631 = vld [vmem:[#allocation2] sm:$0x1]
    %633 = vset.pattern.permute.xlu0 0
    %634 = vperm.xlu0 %633, %v631
    %v635 = vpop.permute.xlu0 %634
    %v637 = vlaneseq
    %v638 = vshrl.u32 %v637, 7
    %v639 = vsub.s32 0, %v638
    %v640 = vrot.slane %v635, %v639
    %vm641 = vcmask 523264
    %v643 = vsel %vm641, %v630, 0
    %645 = vmatprep.subr.mxu0 0.0
    %646 = vmatpush1.msra.mxu0 %v622
    %647 = vmatprep.subr.mxu0 0.0
    %648 = vmatpush1.msra.mxu0 %v623
    %649 = vmatprep.subr.mxu0 0.0
    %650 = vmatpush1.msra.mxu0 %v624
    %651 = vmatprep.subr.mxu0 0.0
    %652 = vmatpush1.msra.mxu0 %v625
    %653 = vmatprep.subr.mxu0 0.0
    %654 = vmatpush1.msra.mxu0 %v626
    %655 = vmatprep.subr.mxu0 0.0
    %656 = vmatpush1.msra.mxu0 %v627
    %657 = vmatprep.subr.mxu0 0.0
    %658 = vmatpush1.msra.mxu0 %v628
    %659 = vmatprep.subr.mxu0 0.0
    %660 = vmatpush1.msra.mxu0 %v629
    %661 = vmatprep.subr.mxu0 0.0
    %662 = vmatpush1.msra.mxu0 0.0
    %663 = vmatprep.subr.mxu0 0.0
    %664 = vmatpush1.msra.mxu0 0.0
    %665 = vmatprep.subr.mxu0 0.0
    %666 = vmatpush1.msra.mxu0 0.0
    %667 = vmatprep.subr.mxu0 0.0
    %668 = vmatpush1.msra.mxu0 0.0
    %669 = vmatprep.subr.mxu0 0.0
    %670 = vmatpush1.msra.mxu0 0.0
    %671 = vmatprep.subr.mxu0 0.0
    %672 = vmatpush1.msra.mxu0 0.0
    %673 = vmatprep.subr.mxu0 0.0
    %674 = vmatpush1.msra.mxu0 0.0
    %675 = vmatprep.subr.mxu0 0.0
    %676 = vmatpush1.msra.mxu0 0.0
    %677 = vmatprep.subr.mxu0 0.0
    %678 = vmatpush1.msra.mxu0 0.0
    %679 = vmatprep.subr.mxu0 0.0
    %680 = vmatpush1.msra.mxu0 0.0
    %681 = vmatprep.subr.mxu0 0.0
    %682 = vmatpush1.msra.mxu0 0.0
    %683 = vmatprep.subr.mxu0 0.0
    %684 = vmatpush1.msra.mxu0 0.0
    %685 = vmatprep.subr.mxu0 0.0
    %686 = vmatpush1.msra.mxu0 0.0
    %687 = vmatprep.subr.mxu0 0.0
    %688 = vmatpush1.msra.mxu0 0.0
    %689 = vmatprep.subr.mxu0 0.0
    %690 = vmatpush1.msra.mxu0 0.0
    %691 = vmatprep.subr.mxu0 0.0
    %692 = vmatpush1.msra.mxu0 0.0
    %693 = vmatprep.subr.mxu0 0.0
    %694 = vmatpush1.msra.mxu0 0.0
    %695 = vmatprep.subr.mxu0 0.0
    %696 = vmatpush1.msra.mxu0 0.0
    %697 = vmatprep.subr.mxu0 0.0
    %698 = vmatpush1.msra.mxu0 0.0
    %699 = vmatprep.subr.mxu0 0.0
    %700 = vmatpush1.msra.mxu0 0.0
    %701 = vmatprep.subr.mxu0 0.0
    %702 = vmatpush1.msra.mxu0 0.0
    %703 = vmatprep.subr.mxu0 0.0
    %704 = vmatpush1.msra.mxu0 0.0
    %705 = vmatprep.subr.mxu0 0.0
    %706 = vmatpush1.msra.mxu0 0.0
    %707 = vmatprep.subr.mxu0 0.0
    %708 = vmatpush1.msra.mxu0 0.0
    %709 = vmatprep.mubr.f32.mxu0 0.0
    %710 = vmatmul.mubr.f32.gmra.mrb[0].mxu0 %v643
    %v711 = vpop.f32.mrb[0].mxu0
    %v712 = vadd.f32 %v640, %v711
    %v713 = vpop.f32.mrb[0].mxu0
    %714 = vdwg.mxu0
    %v715 = vmax.f32 %v712, 0.0
    %v716 = vand.u32 2147483647, %v712
    %v717 = vsub.f32 0.0, %v716
    %v718 = vmul.f32 %v717, 1.442695
    %v719 = vpow.pop %v718
    %v720 = vadd.f32 %v719, 1.0
    %v721 = vlog2.pop %v720
    %v722 = vmul.f32 %v721, 0.6931472
    %v723 = vadd.f32 %v715, %v722
    %v724 = vsub.f32 0.0, %v723
    %725 = vst [vmem:[#allocation3] sm:$0x1] %v724
    %v726 = vsub.f32 %v712, %v723
    %727 = vst [vmem:[#allocation3 + $0x1] sm:$0x1] %v726
    // Predicated region
    $region30: #{tpu_custom_call.1} parent=1 // pred_check
      _
    $region31: #{tpu_custom_call.1} parent=1 // pred_check_branch
      %729 = sbr.rel (0) target = $region33
    $region32: #{tpu_custom_call.1} parent=1 // pred_region
      %s731 = ssub.s32 32, 32
      %732 = vsyncadd [#allocation4], %s731
      %s734 = sshll.u32 [#allocation3], 4
      %s735 = int_to_ptr.vmem [resolvable:$true] %s734
      %737 = dma.vmem_to_hbm [thread:$0]  %s735, 32, %s7, [#allocation4]
    $region33: #{tpu_custom_call.1} parent=1 // pred_fallthru
      _
    // Predicated region
    $region34: #{tpu_custom_call.1} parent=1 // pred_check
      _
    $region35: #{tpu_custom_call.1} parent=1 // pred_check_branch
      %739 = sbr.rel (0) target = $region37
    $region36: #{tpu_custom_call.1} parent=1 // pred_region
      %740 = dma.done [#allocation4], 32
    $region37: #{tpu_custom_call.1} parent=1 // pred_fallthru
      _
    %741 = vsyncpa [#allocation4], 1

</llo_original>
